<compile_context>
chip_gen: v7x
topology: tpu7x:2x2x1
jax: 0.10.0
libtpu: 0.0.40
codegen_flags: <defaults>
</compile_context>

<pallas_src>
import jax
import jax.numpy as jnp
from jax.experimental import pallas as pl
from jax.experimental.pallas import tpu as pltpu


def _pick_tile(dim, want, align):
    """Largest tile <= want that is a multiple of `align` and divides `dim`,
    falling back to the full dimension (always legal as a block size)."""
    if dim <= want:
        return dim
    t = (want // align) * align
    while t > align and dim % t != 0:
        t -= align
    return t if (t >= align and dim % t == 0) else dim


def _block_schedule(g, tm, tk):
    """Per-row-block list of nonzero k-blocks of g (host-side, graph is static)."""
    N, K = g.shape
    nb, kb = N // tm, K // tk
    blk_nz = jnp.abs(g).reshape(nb, tm, kb, tk).sum(axis=(1, 3)) > 0     # (nb, kb)
    cnt = blk_nz.sum(axis=1).astype(jnp.int32)                           # (nb,)
    max_nnz = max(int(jnp.max(cnt)), 1)

    # Nonzero block indices first (ascending), without relying on sort stability.
    kb_idx = jnp.arange(kb, dtype=jnp.int32)[None, :]
    sort_key = jnp.where(blk_nz, kb_idx, kb_idx + kb)
    order = jnp.argsort(sort_key, axis=1).astype(jnp.int32)
    nz_idx = order[:, :max_nnz]

    # Pad the tail slots with the row's last valid index: the block index does
    # not change there, so Pallas skips the (useless) DMA for padded slots.
    slot = jnp.arange(max_nnz, dtype=jnp.int32)[None, :]
    last = jnp.take_along_axis(nz_idx, jnp.maximum(cnt - 1, 0)[:, None], axis=1)
    nz_idx = jnp.where(slot < cnt[:, None], nz_idx, last)
    return nz_idx, cnt, max_nnz


def _make_kernel(tk, x_resident, use_acc_scratch):
    def kernel(nz_idx_ref, nz_cnt_ref, g_ref, x_ref, o_ref, *scratch):
        i = pl.program_id(0)
        k = pl.program_id(1)
        acc = scratch[0] if use_acc_scratch else o_ref

        @pl.when(k == 0)
        def _init():
            acc[...] = jnp.zeros_like(acc)

        # Skip padded schedule slots (and fully-empty row blocks).
        @pl.when(k < nz_cnt_ref[i])
        def _accumulate():
            if x_resident:
                start = pl.multiple_of(nz_idx_ref[i, k] * tk, tk)
                x_blk = x_ref[pl.ds(start, tk), :]
            else:
                x_blk = x_ref[...]
            acc[...] += jnp.dot(
                g_ref[...], x_blk, preferred_element_type=jnp.float32
            )

        if use_acc_scratch:
            @pl.when(k == pl.num_programs(1) - 1)
            def _store():
                o_ref[...] = acc[...].astype(o_ref.dtype)

    return kernel


def ode_function_forward(t, g, x, *, tm=512, tk=256):
    """Pallas equivalent of ODEFunction.forward(t, x): returns g @ x.

    `t` is accepted for API parity with the torch module but unused
    (non-time-dependent ODE function).  The block-sparse schedule of `g` is
    computed eagerly (once per graph), so call this outside jit or hoist the
    schedule if g is reused across many ODE steps.
    """
    del t
    N, K = g.shape
    K2, D = x.shape
    assert K == K2, "graph / feature shape mismatch"

    tm = _pick_tile(N, tm, 8)     # row tile: sublane-aligned or full N
    tk = _pick_tile(K, tk, 128)   # reduction tile: lane-aligned or full K

    nz_idx, nz_cnt, max_nnz = _block_schedule(g, tm, tk)
    nb = N // tm
    grid = (nb, max_nnz)

    out_dtype = x.dtype
    use_acc_scratch = out_dtype != jnp.float32

    # Keep x fully resident in VMEM when it comfortably fits (budget re-derived
    # conservatively for v7x's 64 MiB physical VMEM); otherwise fetch x blocks
    # with the same data-dependent index map as g.
    x_bytes = K * D * x.dtype.itemsize
    x_resident = x_bytes <= (8 << 20)

    if x_resident:
        x_spec = pl.BlockSpec((K, D), lambda i, k, idx, cnt: (0, 0))
    else:
        x_spec = pl.BlockSpec((tk, D), lambda i, k, idx, cnt: (idx[i, k], 0))

    in_specs = [
        pl.BlockSpec((tm, tk), lambda i, k, idx, cnt: (i, idx[i, k])),  # g block
        x_spec,                                                         # x
    ]
    out_spec = pl.BlockSpec((tm, D), lambda i, k, idx, cnt: (i, 0))
    scratch = [pltpu.VMEM((tm, D), jnp.float32)] if use_acc_scratch else []

    # Only set an explicit VMEM limit when the conservative scoped default
    # (16 MiB on v5e) would be exceeded; cap below v7x's 64 MiB physical VMEM.
    need = (
        2 * tm * tk * g.dtype.itemsize                               # g (2 bufs)
        + (2 * x_bytes if x_resident else 2 * tk * D * x.dtype.itemsize)
        + 2 * tm * D * jnp.dtype(out_dtype).itemsize                 # out block
        + (tm * D * 4 if use_acc_scratch else 0)                     # f32 acc
    )
    vmem_limit = min(need + (4 << 20), 56 << 20) if need > (14 << 20) else None

    kernel = _make_kernel(tk, x_resident, use_acc_scratch)

    return pl.pallas_call(
        kernel,
        out_shape=jax.ShapeDtypeStruct((N, D), out_dtype),
        grid_spec=pltpu.PrefetchScalarGridSpec(
            num_scalar_prefetch=2,
            grid=grid,
            in_specs=in_specs,
            out_specs=out_spec,
            scratch_shapes=scratch,
        ),
        compiler_params=pltpu.CompilerParams(
            dimension_semantics=("parallel", "arbitrary"),
            vmem_limit_bytes=vmem_limit,
        ),
    )(nz_idx, nz_cnt, g, x)


def _make_normalized_graph(key, n):
    """Deterministic synthetic symmetric normalized adjacency D^-1/2 A D^-1/2."""
    k1, _ = jax.random.split(key)
    raw = jax.random.uniform(k1, (n, n), dtype=jnp.float32)
    adj = (raw > 0.9).astype(jnp.float32)
    adj = jnp.maximum(adj, adj.T)
    adj = adj + jnp.eye(n, dtype=jnp.float32)
    deg = jnp.sum(adj, axis=1)
    d_inv_sqrt = 1.0 / jnp.sqrt(deg)
    return adj * d_inv_sqrt[:, None] * d_inv_sqrt[None, :]


if __name__ == "__main__":
    key = jax.random.PRNGKey(0)
    kg, kx = jax.random.split(key)

    # Small demo shapes (tiles clamp to a single grid step at this size; real
    # graphs should be benchmarked at production N).
    N, D = 256, 128
    g = _make_normalized_graph(kg, N)                     # (N, N)
    x = jax.random.normal(kx, (N, D), dtype=jnp.float32)  # (N, D)

    t = jnp.float32(0.0)  # unused (non-time-dependent)
    out = ode_function_forward(t, g, x)
    out = jax.block_until_ready(out)

    ref = g @ x
    assert out.shape == (N, D)
    assert jnp.allclose(out, ref, atol=1e-4, rtol=1e-4), "mismatch vs reference"

    print("KERNEL_OK")
</pallas_src>

<mosaic_0001>
module attributes {stable_mosaic.version = 11 : i64} {
  func.func @kernel(%arg0: i32, %arg1: i32, %arg2: memref<1x1xi32, #tpu.memory_space<smem>>, %arg3: memref<1xi32, #tpu.memory_space<smem>>, %arg4: memref<256x256xf32, #tpu.memory_space<vmem>>, %arg5: memref<256x128xf32, #tpu.memory_space<vmem>>, %arg6: memref<256x128xf32, #tpu.memory_space<vmem>>) attributes {dimension_semantics = [#tpu.dimension_semantics<parallel>, #tpu.dimension_semantics<arbitrary>], iteration_bounds = array<i64: 1, 1>, scalar_prefetch = 2 : i64, scratch_operands = 0 : i64, tpu.core_type = #tpu.core_type<tc>, window_params = [{transform_indices = @transform_0, window_bounds = array<i64: 256, 256>}, {pipeline_mode = #tpu.pipeline_mode<synchronous>, transform_indices = @transform_1, window_bounds = array<i64: 256, 128>}, {transform_indices = @transform_2, window_bounds = array<i64: 256, 128>}]} {
    %c0_i32 = arith.constant 0 : i32
    %0 = arith.cmpi eq, %arg1, %c0_i32 : i32
    %1 = arith.extui %0 : i1 to i32
    %c0_i32_0 = arith.constant 0 : i32
    %2 = arith.cmpi ne, %1, %c0_i32_0 : i32
    scf.if %2 {
      %cst = arith.constant 0.000000e+00 : f32
      %8 = vector.broadcast %cst : f32 to vector<256x128xf32>
      %c0 = arith.constant 0 : index
      %c0_2 = arith.constant 0 : index
      %9 = vector.load %arg6[%c0, %c0_2] : memref<256x128xf32, #tpu.memory_space<vmem>>, vector<256x128xf32>
      tpu.vector_store %arg6[%c0, %c0_2], %8 {strides = array<i32>} : memref<256x128xf32, #tpu.memory_space<vmem>>, vector<256x128xf32>,
    } else {
    }
    %3 = arith.index_cast %arg0 : i32 to index
    %4 = memref.load %arg3[%3] : memref<1xi32, #tpu.memory_space<smem>>
    %5 = arith.cmpi slt, %arg1, %4 : i32
    %6 = arith.extui %5 : i1 to i32
    %c0_i32_1 = arith.constant 0 : i32
    %7 = arith.cmpi ne, %6, %c0_i32_1 : i32
    scf.if %7 {
      %8 = arith.index_cast %arg0 : i32 to index
      %9 = arith.index_cast %arg1 : i32 to index
      %10 = memref.load %arg2[%8, %9] : memref<1x1xi32, #tpu.memory_space<smem>>
      %c256_i32 = arith.constant 256 : i32
      %11 = arith.muli %10, %c256_i32 : i32
      %12 = tpu.assume_multiple %11, 256 : i32
      %13 = arith.index_cast %12 : i32 to index
      %c0 = arith.constant 0 : index
      %14 = vector.load %arg5[%13, %c0] : memref<256x128xf32, #tpu.memory_space<vmem>>, vector<256x128xf32>
      %c0_2 = arith.constant 0 : index
      %c0_3 = arith.constant 0 : index
      %15 = vector.load %arg6[%c0_2, %c0_3] : memref<256x128xf32, #tpu.memory_space<vmem>>, vector<256x128xf32>
      %c0_4 = arith.constant 0 : index
      %c0_5 = arith.constant 0 : index
      %16 = vector.load %arg4[%c0_4, %c0_5] : memref<256x256xf32, #tpu.memory_space<vmem>>, vector<256x256xf32>
      %cst = arith.constant dense<0.000000e+00> : vector<256x128xf32>
      %17 = tpu.matmul %16, %14, %cst {dimension_numbers = #tpu.dot_dimension_numbers<[1], [0], [0], [1], [0, 0, 1, 1], [], []>} : vector<256x256xf32>, vector<256x128xf32>, vector<256x128xf32> -> vector<256x128xf32>
      %18 = arith.addf %15, %17 : vector<256x128xf32>
      %c0_6 = arith.constant 0 : index
      %c0_7 = arith.constant 0 : index
      %19 = vector.load %arg6[%c0_6, %c0_7] : memref<256x128xf32, #tpu.memory_space<vmem>>, vector<256x128xf32>
      tpu.vector_store %arg6[%c0_6, %c0_7], %18 {strides = array<i32>} : memref<256x128xf32, #tpu.memory_space<vmem>>, vector<256x128xf32>,
    } else {
    }
    return
  }
  func.func @transform_0(%arg0: i32, %arg1: i32, %arg2: memref<1x1xi32, #tpu.memory_space<smem>>, %arg3: memref<1xi32, #tpu.memory_space<smem>>) -> (i32, i32) {
    %0 = arith.index_cast %arg0 : i32 to index
    %1 = arith.index_cast %arg1 : i32 to index
    %2 = memref.load %arg2[%0, %1] : memref<1x1xi32, #tpu.memory_space<smem>>
    %c0_i32 = arith.constant 0 : i32
    return %arg0, %2 : i32, i32
  }
  func.func @transform_1(%arg0: i32, %arg1: i32, %arg2: memref<1x1xi32, #tpu.memory_space<smem>>, %arg3: memref<1xi32, #tpu.memory_space<smem>>) -> (i32, i32) {
    %c0_i32 = arith.constant 0 : i32
    %c0_i32_0 = arith.constant 0 : i32
    %c0_i32_1 = arith.constant 0 : i32
    return %c0_i32, %c0_i32_0 : i32, i32
  }
  func.func @transform_2(%arg0: i32, %arg1: i32, %arg2: memref<1x1xi32, #tpu.memory_space<smem>>, %arg3: memref<1xi32, #tpu.memory_space<smem>>) -> (i32, i32) {
    %c0_i32 = arith.constant 0 : i32
    %c0_i32_0 = arith.constant 0 : i32
    return %arg0, %c0_i32 : i32, i32
  }
}

</mosaic_0001>

<llo_original>
// kernel: tpu_custom_call.1
$region0: #{tpu_custom_call.1}
  #allocation0 [shape = 'u32[]', space=smem, size = 0x4, offset = 0x4, fixed_abs, tag = 'smem constant byte address 0x4 - core index']
  #allocation1 [shape = 'u32[144,128]{1,0:T(1,128)}', space=vmem, size = 0x12000, scoped, tag = 'internal scratch']
  #allocation2 [shape = 's32[1]{0}', space=sflag, size = 0x4, scoped, tag = 'scoped memory for tpu_custom_call.1']
  #allocation3 [shape = 's32[1,1]{1,0:T(1,128)S(6)}', space=smem, size = 0x200, scoped, tag = 'prefetched SMEM operand 0']
  #allocation4 [shape = 's32[1]{0:T(128)S(6)}', space=smem, size = 0x200, scoped, tag = 'prefetched SMEM operand 1']
  %s0 = inlined_call_operand.<no memory space> [shape: s32[1,1], index: 0, kind: input, shape index: {}]
  %s1 = inlined_call_operand.<no memory space> [shape: s32[1], index: 1, kind: input, shape index: {}]
  %s2 = inlined_call_operand.hbm [shape: f32[256,256], index: 2, kind: input, shape index: {}]
  %s3 = inlined_call_operand.hbm [shape: f32[256,128], index: 3, kind: input, shape index: {}]
  %s4 = inlined_call_operand.hbm [shape: f32[256,128], index: 4, kind: output, shape index: {}]
  %s5 = sld [smem:[#allocation0]]
  $region34: #{tpu_custom_call.1} parent=0
    _
  %s7 = ssub.s32 1, %s5
  %s8 = scalar_select 0, %s7, %s5
  %9 = sst [smem:[#allocation3]] %s0
  %10 = sst [smem:[#allocation4]] %s1
  $region1: #{tpu_custom_call.1} parent=0
    #allocation5 [shape = 'u8[262144]{0}', space=vmem, size = 0x40000, scoped, tag = 'input window, operand 2, single buffered']
    #allocation6 [shape = 's32[1]{0}', space=sflag, size = 0x4, scoped, tag = 'scoped memory for tpu_custom_call.1']
    #allocation7 [shape = 's32[1]{0}', space=sflag, size = 0x4, scoped, tag = 'scoped memory for tpu_custom_call.1']
    #allocation8 [shape = 'u8[131072]{0}', space=vmem, size = 0x20000, scoped, tag = 'input window, operand 3, single buffered']
    #allocation9 [shape = 's32[1]{0}', space=sflag, size = 0x4, scoped, tag = 'scoped memory for tpu_custom_call.1']
    #allocation10 [shape = 'u8[131072]{0}', space=vmem, size = 0x20000, scoped, tag = 'output window, operand 0, single buffered']
    %11 = vsyncpa [#allocation6], 0
    %12 = vsyncpa [#allocation9], 0
    %13 = vsyncpa [#allocation7], 0
    // Predicated region
    $region2: #{tpu_custom_call.1} parent=1 // pred_check
      _
    $region3: #{tpu_custom_call.1} parent=1 // pred_check_branch
      %15 = sbr.rel (0) target = $region5
    $region4: #{tpu_custom_call.1} parent=1 // pred_region
      %s16 = sadd.s32 0, 0
      %s17 = smul.u32 %s16, 128
      %s18 = sadd.s32 %s17, 0
      %s19 = sld [smem:[#allocation3 + %s18]]
      %s20 = smul.u32 2, %s19
      %s22 = ssub.s32 8192, 8192
      %23 = vsyncadd [#allocation6], %s22
      %s24 = smul.addr %s20, 128
      %s25 = scalar_lea.hbm %s2, %s24
      %s26 = sshll.u32 [#allocation5], 4
      %s27 = int_to_ptr.vmem [resolvable:$true] %s26
      %32 = dma.hbm_to_vmem [thread:$0]  %s25, 8192, %s27, [#allocation6], 256, 256, 16
    $region5: #{tpu_custom_call.1} parent=1 // pred_fallthru
      _
    // Predicated region
    $region6: #{tpu_custom_call.1} parent=1 // pred_check
      _
    $region7: #{tpu_custom_call.1} parent=1 // pred_check_branch
      %34 = sbr.rel (0) target = $region9
    $region8: #{tpu_custom_call.1} parent=1 // pred_region
      %s36 = ssub.s32 4096, 4096
      %37 = vsyncadd [#allocation9], %s36
      %s38 = sshll.u32 [#allocation8], 4
      %s39 = int_to_ptr.vmem [resolvable:$true] %s38
      %44 = dma.hbm_to_vmem [thread:$0]  %s3, 4096, %s39, [#allocation9], 128, 128, 8
    $region9: #{tpu_custom_call.1} parent=1 // pred_fallthru
      _
    // Predicated region
    $region10: #{tpu_custom_call.1} parent=1 // pred_check
      _
    $region11: #{tpu_custom_call.1} parent=1 // pred_check_branch
      %46 = sbr.rel (0) target = $region13
    $region12: #{tpu_custom_call.1} parent=1 // pred_region
      %47 = dma.done [#allocation6], 8192
    $region13: #{tpu_custom_call.1} parent=1 // pred_fallthru
      _
    // Predicated region
    $region14: #{tpu_custom_call.1} parent=1 // pred_check
      _
    $region15: #{tpu_custom_call.1} parent=1 // pred_check_branch
      %49 = sbr.rel (0) target = $region17
    $region16: #{tpu_custom_call.1} parent=1 // pred_region
      %50 = dma.done [#allocation9], 4096
    $region17: #{tpu_custom_call.1} parent=1 // pred_fallthru
      _
    %s51 = sadd.s32 0, 0
    %s52 = smul.u32 %s51, 128
    %s53 = sadd.s32 %s52, 0
    %s54 = sld [smem:[#allocation3 + %s53]]
    %s55 = smul.u32 2, %s54
    %p56 = scmp.eq.s32.totalorder 0, 0
    // Predicated region
    $region18: #{tpu_custom_call.1} parent=1 // pred_check
      %p57 = pneg %p56
    $region19: #{tpu_custom_call.1} parent=1 // pred_check_branch
      %59 = sbr.rel (%p57) target = $region21
    $region20: #{tpu_custom_call.1} parent=1 // pred_region
      %60 = vst [vmem:[#allocation10] sm:$0xff] 0.0
      %61 = vst [vmem:[#allocation10 + $0x8] sm:$0xff] 0.0
      %62 = vst [vmem:[#allocation10 + $0x10] sm:$0xff] 0.0
      %63 = vst [vmem:[#allocation10 + $0x18] sm:$0xff] 0.0
      %64 = vst [vmem:[#allocation10 + $0x20] sm:$0xff] 0.0
      %65 = vst [vmem:[#allocation10 + $0x28] sm:$0xff] 0.0
      %66 = vst [vmem:[#allocation10 + $0x30] sm:$0xff] 0.0
      %67 = vst [vmem:[#allocation10 + $0x38] sm:$0xff] 0.0
      %68 = vst [vmem:[#allocation10 + $0x40] sm:$0xff] 0.0
      %69 = vst [vmem:[#allocation10 + $0x48] sm:$0xff] 0.0
      %70 = vst [vmem:[#allocation10 + $0x50] sm:$0xff] 0.0
      %71 = vst [vmem:[#allocation10 + $0x58] sm:$0xff] 0.0
      %72 = vst [vmem:[#allocation10 + $0x60] sm:$0xff] 0.0
      %73 = vst [vmem:[#allocation10 + $0x68] sm:$0xff] 0.0
      %74 = vst [vmem:[#allocation10 + $0x70] sm:$0xff] 0.0
      %75 = vst [vmem:[#allocation10 + $0x78] sm:$0xff] 0.0
      %76 = vst [vmem:[#allocation10 + $0x80] sm:$0xff] 0.0
      %77 = vst [vmem:[#allocation10 + $0x88] sm:$0xff] 0.0
      %78 = vst [vmem:[#allocation10 + $0x90] sm:$0xff] 0.0
      %79 = vst [vmem:[#allocation10 + $0x98] sm:$0xff] 0.0
      %80 = vst [vmem:[#allocation10 + $0xa0] sm:$0xff] 0.0
      %81 = vst [vmem:[#allocation10 + $0xa8] sm:$0xff] 0.0
      %82 = vst [vmem:[#allocation10 + $0xb0] sm:$0xff] 0.0
      %83 = vst [vmem:[#allocation10 + $0xb8] sm:$0xff] 0.0
      %84 = vst [vmem:[#allocation10 + $0xc0] sm:$0xff] 0.0
      %85 = vst [vmem:[#allocation10 + $0xc8] sm:$0xff] 0.0
      %86 = vst [vmem:[#allocation10 + $0xd0] sm:$0xff] 0.0
      %87 = vst [vmem:[#allocation10 + $0xd8] sm:$0xff] 0.0
      %88 = vst [vmem:[#allocation10 + $0xe0] sm:$0xff] 0.0
      %89 = vst [vmem:[#allocation10 + $0xe8] sm:$0xff] 0.0
      %90 = vst [vmem:[#allocation10 + $0xf0] sm:$0xff] 0.0
      %91 = vst [vmem:[#allocation10 + $0xf8] sm:$0xff] 0.0
    $region21: #{tpu_custom_call.1} parent=1 // pred_fallthru
      _
    %s92 = sld [smem:[#allocation4]]
    %p93 = scmp.lt.s32.totalorder 0, %s92
    // Predicated region
    $region22: #{tpu_custom_call.1} parent=1 // pred_check
      %p94 = pneg %p93
    $region23: #{tpu_custom_call.1} parent=1 // pred_check_branch
      %96 = sbr.rel (%p94) target = $region25
    $region24: #{tpu_custom_call.1} parent=1 // pred_region
      %s97 = sadd.s32 0, 0
      %s98 = smul.u32 %s97, 128
      %s99 = sadd.s32 %s98, 0
      %s100 = sld [smem:[#allocation3 + %s99]]
      %s101 = smul.u32 %s100, 256
      %s102 = scalar_lea.vmem [#allocation8], %s101
      %v103 = vld [vmem:[%s102] sm:$0xff]
      %v104 = vld [vmem:[%s102 + $0x8] sm:$0xff]
      %v105 = vld [vmem:[%s102 + $0x10] sm:$0xff]
      %v106 = vld [vmem:[%s102 + $0x18] sm:$0xff]
      %v107 = vld [vmem:[%s102 + $0x20] sm:$0xff]
      %v108 = vld [vmem:[%s102 + $0x28] sm:$0xff]
      %v109 = vld [vmem:[%s102 + $0x30] sm:$0xff]
      %v110 = vld [vmem:[%s102 + $0x38] sm:$0xff]
      %v111 = vld [vmem:[%s102 + $0x40] sm:$0xff]
      %v112 = vld [vmem:[%s102 + $0x48] sm:$0xff]
      %v113 = vld [vmem:[%s102 + $0x50] sm:$0xff]
      %v114 = vld [vmem:[%s102 + $0x58] sm:$0xff]
      %v115 = vld [vmem:[%s102 + $0x60] sm:$0xff]
      %v116 = vld [vmem:[%s102 + $0x68] sm:$0xff]
      %v117 = vld [vmem:[%s102 + $0x70] sm:$0xff]
      %v118 = vld [vmem:[%s102 + $0x78] sm:$0xff]
      %v119 = vld [vmem:[%s102 + $0x80] sm:$0xff]
      %v120 = vld [vmem:[%s102 + $0x88] sm:$0xff]
      %v121 = vld [vmem:[%s102 + $0x90] sm:$0xff]
      %v122 = vld [vmem:[%s102 + $0x98] sm:$0xff]
      %v123 = vld [vmem:[%s102 + $0xa0] sm:$0xff]
      %v124 = vld [vmem:[%s102 + $0xa8] sm:$0xff]
      %v125 = vld [vmem:[%s102 + $0xb0] sm:$0xff]
      %v126 = vld [vmem:[%s102 + $0xb8] sm:$0xff]
      %v127 = vld [vmem:[%s102 + $0xc0] sm:$0xff]
      %v128 = vld [vmem:[%s102 + $0xc8] sm:$0xff]
      %v129 = vld [vmem:[%s102 + $0xd0] sm:$0xff]
      %v130 = vld [vmem:[%s102 + $0xd8] sm:$0xff]
      %v131 = vld [vmem:[%s102 + $0xe0] sm:$0xff]
      %v132 = vld [vmem:[%s102 + $0xe8] sm:$0xff]
      %v133 = vld [vmem:[%s102 + $0xf0] sm:$0xff]
      %v134 = vld [vmem:[%s102 + $0xf8] sm:$0xff]
      %v135 = vld [vmem:[#allocation10] sm:$0xff]
      %v136 = vld [vmem:[#allocation10 + $0x8] sm:$0xff]
      %v137 = vld [vmem:[#allocation10 + $0x10] sm:$0xff]
      %v138 = vld [vmem:[#allocation10 + $0x18] sm:$0xff]
      %v139 = vld [vmem:[#allocation10 + $0x20] sm:$0xff]
      %v140 = vld [vmem:[#allocation10 + $0x28] sm:$0xff]
      %v141 = vld [vmem:[#allocation10 + $0x30] sm:$0xff]
      %v142 = vld [vmem:[#allocation10 + $0x38] sm:$0xff]
      %v143 = vld [vmem:[#allocation10 + $0x40] sm:$0xff]
      %v144 = vld [vmem:[#allocation10 + $0x48] sm:$0xff]
      %v145 = vld [vmem:[#allocation10 + $0x50] sm:$0xff]
      %v146 = vld [vmem:[#allocation10 + $0x58] sm:$0xff]
      %v147 = vld [vmem:[#allocation10 + $0x60] sm:$0xff]
      %v148 = vld [vmem:[#allocation10 + $0x68] sm:$0xff]
      %v149 = vld [vmem:[#allocation10 + $0x70] sm:$0xff]
      %v150 = vld [vmem:[#allocation10 + $0x78] sm:$0xff]
      %v151 = vld [vmem:[#allocation10 + $0x80] sm:$0xff]
      %v152 = vld [vmem:[#allocation10 + $0x88] sm:$0xff]
      %v153 = vld [vmem:[#allocation10 + $0x90] sm:$0xff]
      %v154 = vld [vmem:[#allocation10 + $0x98] sm:$0xff]
      %v155 = vld [vmem:[#allocation10 + $0xa0] sm:$0xff]
      %v156 = vld [vmem:[#allocation10 + $0xa8] sm:$0xff]
      %v157 = vld [vmem:[#allocation10 + $0xb0] sm:$0xff]
      %v158 = vld [vmem:[#allocation10 + $0xb8] sm:$0xff]
      %v159 = vld [vmem:[#allocation10 + $0xc0] sm:$0xff]
      %v160 = vld [vmem:[#allocation10 + $0xc8] sm:$0xff]
      %v161 = vld [vmem:[#allocation10 + $0xd0] sm:$0xff]
      %v162 = vld [vmem:[#allocation10 + $0xd8] sm:$0xff]
      %v163 = vld [vmem:[#allocation10 + $0xe0] sm:$0xff]
      %v164 = vld [vmem:[#allocation10 + $0xe8] sm:$0xff]
      %v165 = vld [vmem:[#allocation10 + $0xf0] sm:$0xff]
      %v166 = vld [vmem:[#allocation10 + $0xf8] sm:$0xff]
      %v167 = vld [vmem:[#allocation5] sm:$0xff]
      %v168 = vld [vmem:[#allocation5 + $0x8] sm:$0xff]
      %v169 = vld [vmem:[#allocation5 + $0x10] sm:$0xff]
      %v170 = vld [vmem:[#allocation5 + $0x18] sm:$0xff]
      %v171 = vld [vmem:[#allocation5 + $0x20] sm:$0xff]
      %v172 = vld [vmem:[#allocation5 + $0x28] sm:$0xff]
      %v173 = vld [vmem:[#allocation5 + $0x30] sm:$0xff]
      %v174 = vld [vmem:[#allocation5 + $0x38] sm:$0xff]
      %v175 = vld [vmem:[#allocation5 + $0x40] sm:$0xff]
      %v176 = vld [vmem:[#allocation5 + $0x48] sm:$0xff]
      %v177 = vld [vmem:[#allocation5 + $0x50] sm:$0xff]
      %v178 = vld [vmem:[#allocation5 + $0x58] sm:$0xff]
      %v179 = vld [vmem:[#allocation5 + $0x60] sm:$0xff]
      %v180 = vld [vmem:[#allocation5 + $0x68] sm:$0xff]
      %v181 = vld [vmem:[#allocation5 + $0x70] sm:$0xff]
      %v182 = vld [vmem:[#allocation5 + $0x78] sm:$0xff]
      %v183 = vld [vmem:[#allocation5 + $0x80] sm:$0xff]
      %v184 = vld [vmem:[#allocation5 + $0x88] sm:$0xff]
      %v185 = vld [vmem:[#allocation5 + $0x90] sm:$0xff]
      %v186 = vld [vmem:[#allocation5 + $0x98] sm:$0xff]
      %v187 = vld [vmem:[#allocation5 + $0xa0] sm:$0xff]
      %v188 = vld [vmem:[#allocation5 + $0xa8] sm:$0xff]
      %v189 = vld [vmem:[#allocation5 + $0xb0] sm:$0xff]
      %v190 = vld [vmem:[#allocation5 + $0xb8] sm:$0xff]
      %v191 = vld [vmem:[#allocation5 + $0xc0] sm:$0xff]
      %v192 = vld [vmem:[#allocation5 + $0xc8] sm:$0xff]
      %v193 = vld [vmem:[#allocation5 + $0xd0] sm:$0xff]
      %v194 = vld [vmem:[#allocation5 + $0xd8] sm:$0xff]
      %v195 = vld [vmem:[#allocation5 + $0xe0] sm:$0xff]
      %v196 = vld [vmem:[#allocation5 + $0xe8] sm:$0xff]
      %v197 = vld [vmem:[#allocation5 + $0xf0] sm:$0xff]
      %v198 = vld [vmem:[#allocation5 + $0xf8] sm:$0xff]
      %v199 = vld [vmem:[#allocation5 + $0x100] sm:$0xff]
      %v200 = vld [vmem:[#allocation5 + $0x108] sm:$0xff]
      %v201 = vld [vmem:[#allocation5 + $0x110] sm:$0xff]
      %v202 = vld [vmem:[#allocation5 + $0x118] sm:$0xff]
      %v203 = vld [vmem:[#allocation5 + $0x120] sm:$0xff]
      %v204 = vld [vmem:[#allocation5 + $0x128] sm:$0xff]
      %v205 = vld [vmem:[#allocation5 + $0x130] sm:$0xff]
      %v206 = vld [vmem:[#allocation5 + $0x138] sm:$0xff]
      %v207 = vld [vmem:[#allocation5 + $0x140] sm:$0xff]
      %v208 = vld [vmem:[#allocation5 + $0x148] sm:$0xff]
      %v209 = vld [vmem:[#allocation5 + $0x150] sm:$0xff]
      %v210 = vld [vmem:[#allocation5 + $0x158] sm:$0xff]
      %v211 = vld [vmem:[#allocation5 + $0x160] sm:$0xff]
      %v212 = vld [vmem:[#allocation5 + $0x168] sm:$0xff]
      %v213 = vld [vmem:[#allocation5 + $0x170] sm:$0xff]
      %v214 = vld [vmem:[#allocation5 + $0x178] sm:$0xff]
      %v215 = vld [vmem:[#allocation5 + $0x180] sm:$0xff]
      %v216 = vld [vmem:[#allocation5 + $0x188] sm:$0xff]
      %v217 = vld [vmem:[#allocation5 + $0x190] sm:$0xff]
      %v218 = vld [vmem:[#allocation5 + $0x198] sm:$0xff]
      %v219 = vld [vmem:[#allocation5 + $0x1a0] sm:$0xff]
      %v220 = vld [vmem:[#allocation5 + $0x1a8] sm:$0xff]
      %v221 = vld [vmem:[#allocation5 + $0x1b0] sm:$0xff]
      %v222 = vld [vmem:[#allocation5 + $0x1b8] sm:$0xff]
      %v223 = vld [vmem:[#allocation5 + $0x1c0] sm:$0xff]
      %v224 = vld [vmem:[#allocation5 + $0x1c8] sm:$0xff]
      %v225 = vld [vmem:[#allocation5 + $0x1d0] sm:$0xff]
      %v226 = vld [vmem:[#allocation5 + $0x1d8] sm:$0xff]
      %v227 = vld [vmem:[#allocation5 + $0x1e0] sm:$0xff]
      %v228 = vld [vmem:[#allocation5 + $0x1e8] sm:$0xff]
      %v229 = vld [vmem:[#allocation5 + $0x1f0] sm:$0xff]
      %v230 = vld [vmem:[#allocation5 + $0x1f8] sm:$0xff]
      %231 = vmatprep.subr.mxu0 0.0
      %232 = vmatpush1.msra.mxu0 %v103
      %233 = vmatprep.subr.mxu0 0.0
      %234 = vmatpush1.msra.mxu0 %v104
      %235 = vmatprep.subr.mxu0 0.0
      %236 = vmatpush1.msra.mxu0 %v105
      %237 = vmatprep.subr.mxu0 0.0
      %238 = vmatpush1.msra.mxu0 %v106
      %239 = vmatprep.subr.mxu0 0.0
      %240 = vmatpush1.msra.mxu0 %v107
      %241 = vmatprep.subr.mxu0 0.0
      %242 = vmatpush1.msra.mxu0 %v108
      %243 = vmatprep.subr.mxu0 0.0
      %244 = vmatpush1.msra.mxu0 %v109
      %245 = vmatprep.subr.mxu0 0.0
      %246 = vmatpush1.msra.mxu0 %v110
      %247 = vmatprep.subr.mxu0 0.0
      %248 = vmatpush1.msra.mxu0 %v111
      %249 = vmatprep.subr.mxu0 0.0
      %250 = vmatpush1.msra.mxu0 %v112
      %251 = vmatprep.subr.mxu0 0.0
      %252 = vmatpush1.msra.mxu0 %v113
      %253 = vmatprep.subr.mxu0 0.0
      %254 = vmatpush1.msra.mxu0 %v114
      %255 = vmatprep.subr.mxu0 0.0
      %256 = vmatpush1.msra.mxu0 %v115
      %257 = vmatprep.subr.mxu0 0.0
      %258 = vmatpush1.msra.mxu0 %v116
      %259 = vmatprep.subr.mxu0 0.0
      %260 = vmatpush1.msra.mxu0 %v117
      %261 = vmatprep.subr.mxu0 0.0
      %262 = vmatpush1.msra.mxu0 %v118
      %263 = vmatprep.subr.mxu0 0.0
      %264 = vmatpush1.msra.mxu0 %v119
      %265 = vmatprep.subr.mxu0 0.0
      %266 = vmatpush1.msra.mxu0 %v120
      %267 = vmatprep.subr.mxu0 0.0
      %268 = vmatpush1.msra.mxu0 %v121
      %269 = vmatprep.subr.mxu0 0.0
      %270 = vmatpush1.msra.mxu0 %v122
      %271 = vmatprep.subr.mxu0 0.0
      %272 = vmatpush1.msra.mxu0 %v123
      %273 = vmatprep.subr.mxu0 0.0
      %274 = vmatpush1.msra.mxu0 %v124
      %275 = vmatprep.subr.mxu0 0.0
      %276 = vmatpush1.msra.mxu0 %v125
      %277 = vmatprep.subr.mxu0 0.0
      %278 = vmatpush1.msra.mxu0 %v126
      %279 = vmatprep.subr.mxu0 0.0
      %280 = vmatpush1.msra.mxu0 %v127
      %281 = vmatprep.subr.mxu0 0.0
      %282 = vmatpush1.msra.mxu0 %v128
      %283 = vmatprep.subr.mxu0 0.0
      %284 = vmatpush1.msra.mxu0 %v129
      %285 = vmatprep.subr.mxu0 0.0
      %286 = vmatpush1.msra.mxu0 %v130
      %287 = vmatprep.subr.mxu0 0.0
      %288 = vmatpush1.msra.mxu0 %v131
      %289 = vmatprep.subr.mxu0 0.0
      %290 = vmatpush1.msra.mxu0 %v132
      %291 = vmatprep.subr.mxu0 0.0
      %292 = vmatpush1.msra.mxu0 %v133
      %293 = vmatprep.subr.mxu0 0.0
      %294 = vmatpush1.msra.mxu0 %v134
      %295 = vmatprep.mubr.f32.mxu0 %v168
      %296 = vmatmul.mubr.f32.gmra.mrb[0].mxu0 %v167
      %v297 = vpop.f32.mrb[0].mxu0
      %v298 = vadd.f32 0.0, %v297
      %v299 = vpop.f32.mrb[0].mxu0
      %300 = vmatprep.mubr.f32.mxu0 %v170
      %301 = vmatmul.mubr.f32.gmra.mrb[0].mxu0 %v169
      %v302 = vpop.f32.mrb[0].mxu0
      %v303 = vadd.f32 0.0, %v302
      %v304 = vpop.f32.mrb[0].mxu0
      %305 = vmatprep.mubr.f32.mxu0 %v172
      %306 = vmatmul.mubr.f32.gmra.mrb[0].mxu0 %v171
      %v307 = vpop.f32.mrb[0].mxu0
      %v308 = vadd.f32 0.0, %v307
      %v309 = vpop.f32.mrb[0].mxu0
      %310 = vmatprep.mubr.f32.mxu0 %v174
      %311 = vmatmul.mubr.f32.gmra.mrb[0].mxu0 %v173
      %v312 = vpop.f32.mrb[0].mxu0
      %v313 = vadd.f32 0.0, %v312
      %v314 = vpop.f32.mrb[0].mxu0
      %315 = vmatprep.mubr.f32.mxu0 %v176
      %316 = vmatmul.mubr.f32.gmra.mrb[0].mxu0 %v175
      %v317 = vpop.f32.mrb[0].mxu0
      %v318 = vadd.f32 0.0, %v317
      %v319 = vpop.f32.mrb[0].mxu0
      %320 = vmatprep.mubr.f32.mxu0 %v178
      %321 = vmatmul.mubr.f32.gmra.mrb[0].mxu0 %v177
      %v322 = vpop.f32.mrb[0].mxu0
      %v323 = vadd.f32 0.0, %v322
      %v324 = vpop.f32.mrb[0].mxu0
      %325 = vmatprep.mubr.f32.mxu0 %v180
      %326 = vmatmul.mubr.f32.gmra.mrb[0].mxu0 %v179
      %v327 = vpop.f32.mrb[0].mxu0
      %v328 = vadd.f32 0.0, %v327
      %v329 = vpop.f32.mrb[0].mxu0
      %330 = vmatprep.mubr.f32.mxu0 %v182
      %331 = vmatmul.mubr.f32.gmra.mrb[0].mxu0 %v181
      %v332 = vpop.f32.mrb[0].mxu0
      %v333 = vadd.f32 0.0, %v332
      %v334 = vpop.f32.mrb[0].mxu0
      %335 = vmatprep.mubr.f32.mxu0 %v184
      %336 = vmatmul.mubr.f32.gmra.mrb[0].mxu0 %v183
      %v337 = vpop.f32.mrb[0].mxu0
      %v338 = vadd.f32 0.0, %v337
      %v339 = vpop.f32.mrb[0].mxu0
      %340 = vmatprep.mubr.f32.mxu0 %v186
      %341 = vmatmul.mubr.f32.gmra.mrb[0].mxu0 %v185
      %v342 = vpop.f32.mrb[0].mxu0
      %v343 = vadd.f32 0.0, %v342
      %v344 = vpop.f32.mrb[0].mxu0
      %345 = vmatprep.mubr.f32.mxu0 %v188
      %346 = vmatmul.mubr.f32.gmra.mrb[0].mxu0 %v187
      %v347 = vpop.f32.mrb[0].mxu0
      %v348 = vadd.f32 0.0, %v347
      %v349 = vpop.f32.mrb[0].mxu0
      %350 = vmatprep.mubr.f32.mxu0 %v190
      %351 = vmatmul.mubr.f32.gmra.mrb[0].mxu0 %v189
      %v352 = vpop.f32.mrb[0].mxu0
      %v353 = vadd.f32 0.0, %v352
      %v354 = vpop.f32.mrb[0].mxu0
      %355 = vmatprep.mubr.f32.mxu0 %v192
      %356 = vmatmul.mubr.f32.gmra.mrb[0].mxu0 %v191
      %v357 = vpop.f32.mrb[0].mxu0
      %v358 = vadd.f32 0.0, %v357
      %v359 = vpop.f32.mrb[0].mxu0
      %360 = vmatprep.mubr.f32.mxu0 %v194
      %361 = vmatmul.mubr.f32.gmra.mrb[0].mxu0 %v193
      %v362 = vpop.f32.mrb[0].mxu0
      %v363 = vadd.f32 0.0, %v362
      %v364 = vpop.f32.mrb[0].mxu0
      %365 = vmatprep.mubr.f32.mxu0 %v196
      %366 = vmatmul.mubr.f32.gmra.mrb[0].mxu0 %v195
      %v367 = vpop.f32.mrb[0].mxu0
      %v368 = vadd.f32 0.0, %v367
      %v369 = vpop.f32.mrb[0].mxu0
      %370 = vmatprep.mubr.f32.mxu0 %v198
      %371 = vmatmul.mubr.f32.gmra.mrb[0].mxu0 %v197
      %v372 = vpop.f32.mrb[0].mxu0
      %v373 = vadd.f32 0.0, %v372
      %v374 = vpop.f32.mrb[0].mxu0
      %375 = vmatprep.mubr.f32.mxu0 %v200
      %376 = vmatmul.mubr.f32.gmra.mrb[0].mxu0 %v199
      %v377 = vpop.f32.mrb[0].mxu0
      %v378 = vadd.f32 0.0, %v377
      %v379 = vpop.f32.mrb[0].mxu0
      %380 = vmatprep.mubr.f32.mxu0 %v202
      %381 = vmatmul.mubr.f32.gmra.mrb[0].mxu0 %v201
      %v382 = vpop.f32.mrb[0].mxu0
      %v383 = vadd.f32 0.0, %v382
      %v384 = vpop.f32.mrb[0].mxu0
      %385 = vmatprep.mubr.f32.mxu0 %v204
      %386 = vmatmul.mubr.f32.gmra.mrb[0].mxu0 %v203
      %v387 = vpop.f32.mrb[0].mxu0
      %v388 = vadd.f32 0.0, %v387
      %v389 = vpop.f32.mrb[0].mxu0
      %390 = vmatprep.mubr.f32.mxu0 %v206
      %391 = vmatmul.mubr.f32.gmra.mrb[0].mxu0 %v205
      %v392 = vpop.f32.mrb[0].mxu0
      %v393 = vadd.f32 0.0, %v392
      %v394 = vpop.f32.mrb[0].mxu0
      %395 = vmatprep.mubr.f32.mxu0 %v208
      %396 = vmatmul.mubr.f32.gmra.mrb[0].mxu0 %v207
      %v397 = vpop.f32.mrb[0].mxu0
      %v398 = vadd.f32 0.0, %v397
      %v399 = vpop.f32.mrb[0].mxu0
      %400 = vmatprep.mubr.f32.mxu0 %v210
      %401 = vmatmul.mubr.f32.gmra.mrb[0].mxu0 %v209
      %v402 = vpop.f32.mrb[0].mxu0
      %v403 = vadd.f32 0.0, %v402
      %v404 = vpop.f32.mrb[0].mxu0
      %405 = vmatprep.mubr.f32.mxu0 %v212
      %406 = vmatmul.mubr.f32.gmra.mrb[0].mxu0 %v211
      %v407 = vpop.f32.mrb[0].mxu0
      %v408 = vadd.f32 0.0, %v407
      %v409 = vpop.f32.mrb[0].mxu0
      %410 = vmatprep.mubr.f32.mxu0 %v214
      %411 = vmatmul.mubr.f32.gmra.mrb[0].mxu0 %v213
      %v412 = vpop.f32.mrb[0].mxu0
      %v413 = vadd.f32 0.0, %v412
      %v414 = vpop.f32.mrb[0].mxu0
      %415 = vmatprep.mubr.f32.mxu0 %v216
      %416 = vmatmul.mubr.f32.gmra.mrb[0].mxu0 %v215
      %v417 = vpop.f32.mrb[0].mxu0
      %v418 = vadd.f32 0.0, %v417
      %v419 = vpop.f32.mrb[0].mxu0
      %420 = vmatprep.mubr.f32.mxu0 %v218
      %421 = vmatmul.mubr.f32.gmra.mrb[0].mxu0 %v217
      %v422 = vpop.f32.mrb[0].mxu0
      %v423 = vadd.f32 0.0, %v422
      %v424 = vpop.f32.mrb[0].mxu0
      %425 = vmatprep.mubr.f32.mxu0 %v220
      %426 = vmatmul.mubr.f32.gmra.mrb[0].mxu0 %v219
      %v427 = vpop.f32.mrb[0].mxu0
      %v428 = vadd.f32 0.0, %v427
      %v429 = vpop.f32.mrb[0].mxu0
      %430 = vmatprep.mubr.f32.mxu0 %v222
      %431 = vmatmul.mubr.f32.gmra.mrb[0].mxu0 %v221
      %v432 = vpop.f32.mrb[0].mxu0
      %v433 = vadd.f32 0.0, %v432
      %v434 = vpop.f32.mrb[0].mxu0
      %435 = vmatprep.mubr.f32.mxu0 %v224
      %436 = vmatmul.mubr.f32.gmra.mrb[0].mxu0 %v223
      %v437 = vpop.f32.mrb[0].mxu0
      %v438 = vadd.f32 0.0, %v437
      %v439 = vpop.f32.mrb[0].mxu0
      %440 = vmatprep.mubr.f32.mxu0 %v226
      %441 = vmatmul.mubr.f32.gmra.mrb[0].mxu0 %v225
      %v442 = vpop.f32.mrb[0].mxu0
      %v443 = vadd.f32 0.0, %v442
      %v444 = vpop.f32.mrb[0].mxu0
      %445 = vmatprep.mubr.f32.mxu0 %v228
      %446 = vmatmul.mubr.f32.gmra.mrb[0].mxu0 %v227
      %v447 = vpop.f32.mrb[0].mxu0
      %v448 = vadd.f32 0.0, %v447
      %v449 = vpop.f32.mrb[0].mxu0
      %450 = vmatprep.mubr.f32.mxu0 %v230
      %451 = vmatmul.mubr.f32.gmra.mrb[0].mxu0 %v229
      %v452 = vpop.f32.mrb[0].mxu0
      %v453 = vadd.f32 0.0, %v452
      %v454 = vpop.f32.mrb[0].mxu0
      %455 = vdwg.mxu0
      %v456 = vadd.f32 %v135, %v298
      %v457 = vadd.f32 %v136, %v303
      %v458 = vadd.f32 %v137, %v308
      %v459 = vadd.f32 %v138, %v313
      %v460 = vadd.f32 %v139, %v318
      %v461 = vadd.f32 %v140, %v323
      %v462 = vadd.f32 %v141, %v328
      %v463 = vadd.f32 %v142, %v333
      %v464 = vadd.f32 %v143, %v338
      %v465 = vadd.f32 %v144, %v343
      %v466 = vadd.f32 %v145, %v348
      %v467 = vadd.f32 %v146, %v353
      %v468 = vadd.f32 %v147, %v358
      %v469 = vadd.f32 %v148, %v363
      %v470 = vadd.f32 %v149, %v368
      %v471 = vadd.f32 %v150, %v373
      %v472 = vadd.f32 %v151, %v378
      %v473 = vadd.f32 %v152, %v383
      %v474 = vadd.f32 %v153, %v388
      %v475 = vadd.f32 %v154, %v393
      %v476 = vadd.f32 %v155, %v398
      %v477 = vadd.f32 %v156, %v403
      %v478 = vadd.f32 %v157, %v408
      %v479 = vadd.f32 %v158, %v413
      %v480 = vadd.f32 %v159, %v418
      %v481 = vadd.f32 %v160, %v423
      %v482 = vadd.f32 %v161, %v428
      %v483 = vadd.f32 %v162, %v433
      %v484 = vadd.f32 %v163, %v438
      %v485 = vadd.f32 %v164, %v443
      %v486 = vadd.f32 %v165, %v448
      %v487 = vadd.f32 %v166, %v453
      %488 = vst [vmem:[#allocation10] sm:$0xff] %v456
      %489 = vst [vmem:[#allocation10 + $0x8] sm:$0xff] %v457
      %490 = vst [vmem:[#allocation10 + $0x10] sm:$0xff] %v458
      %491 = vst [vmem:[#allocation10 + $0x18] sm:$0xff] %v459
      %492 = vst [vmem:[#allocation10 + $0x20] sm:$0xff] %v460
      %493 = vst [vmem:[#allocation10 + $0x28] sm:$0xff] %v461
      %494 = vst [vmem:[#allocation10 + $0x30] sm:$0xff] %v462
      %495 = vst [vmem:[#allocation10 + $0x38] sm:$0xff] %v463
      %496 = vst [vmem:[#allocation10 + $0x40] sm:$0xff] %v464
      %497 = vst [vmem:[#allocation10 + $0x48] sm:$0xff] %v465
      %498 = vst [vmem:[#allocation10 + $0x50] sm:$0xff] %v466
      %499 = vst [vmem:[#allocation10 + $0x58] sm:$0xff] %v467
      %500 = vst [vmem:[#allocation10 + $0x60] sm:$0xff] %v468
      %501 = vst [vmem:[#allocation10 + $0x68] sm:$0xff] %v469
      %502 = vst [vmem:[#allocation10 + $0x70] sm:$0xff] %v470
      %503 = vst [vmem:[#allocation10 + $0x78] sm:$0xff] %v471
      %504 = vst [vmem:[#allocation10 + $0x80] sm:$0xff] %v472
      %505 = vst [vmem:[#allocation10 + $0x88] sm:$0xff] %v473
      %506 = vst [vmem:[#allocation10 + $0x90] sm:$0xff] %v474
      %507 = vst [vmem:[#allocation10 + $0x98] sm:$0xff] %v475
      %508 = vst [vmem:[#allocation10 + $0xa0] sm:$0xff] %v476
      %509 = vst [vmem:[#allocation10 + $0xa8] sm:$0xff] %v477
      %510 = vst [vmem:[#allocation10 + $0xb0] sm:$0xff] %v478
      %511 = vst [vmem:[#allocation10 + $0xb8] sm:$0xff] %v479
      %512 = vst [vmem:[#allocation10 + $0xc0] sm:$0xff] %v480
      %513 = vst [vmem:[#allocation10 + $0xc8] sm:$0xff] %v481
      %514 = vst [vmem:[#allocation10 + $0xd0] sm:$0xff] %v482
      %515 = vst [vmem:[#allocation10 + $0xd8] sm:$0xff] %v483
      %516 = vst [vmem:[#allocation10 + $0xe0] sm:$0xff] %v484
      %517 = vst [vmem:[#allocation10 + $0xe8] sm:$0xff] %v485
      %518 = vst [vmem:[#allocation10 + $0xf0] sm:$0xff] %v486
      %519 = vst [vmem:[#allocation10 + $0xf8] sm:$0xff] %v487
    $region25: #{tpu_custom_call.1} parent=1 // pred_fallthru
      _
    // Predicated region
    $region26: #{tpu_custom_call.1} parent=1 // pred_check
      _
    $region27: #{tpu_custom_call.1} parent=1 // pred_check_branch
      %521 = sbr.rel (0) target = $region29
    $region28: #{tpu_custom_call.1} parent=1 // pred_region
      %s523 = ssub.s32 4096, 4096
      %524 = vsyncadd [#allocation7], %s523
      %s525 = sshll.u32 [#allocation10], 4
      %s526 = int_to_ptr.vmem [resolvable:$true] %s525
      %531 = dma.vmem_to_hbm [thread:$0]  %s526, 4096, %s4, [#allocation7], 128, 128, 8
    $region29: #{tpu_custom_call.1} parent=1 // pred_fallthru
      _
    // Predicated region
    $region30: #{tpu_custom_call.1} parent=1 // pred_check
      _
    $region31: #{tpu_custom_call.1} parent=1 // pred_check_branch
      %533 = sbr.rel (0) target = $region33
    $region32: #{tpu_custom_call.1} parent=1 // pred_region
      %534 = dma.done [#allocation7], 4096
    $region33: #{tpu_custom_call.1} parent=1 // pred_fallthru
      _
    %535 = vsyncpa [#allocation6], 1
    %536 = vsyncpa [#allocation9], 1
    %537 = vsyncpa [#allocation7], 1

</llo_original>
